<compile_context>
chip_gen: v6e
topology: v6e:2x2x1
jax: 0.10.0
libtpu: 0.0.40
codegen_flags: <defaults>
</compile_context>

<pallas_src>
import jax
import jax.numpy as jnp
from jax.experimental import pallas as pl
from jax.experimental.pallas import tpu as pltpu


def input_proj_kernel(x_ref, wx_ref, b_ref, out_ref):
    """Batched input projection for all timesteps: (T*B, In) @ (In, 4H) + b."""
    out_ref[...] = (
        jnp.dot(x_ref[...], wx_ref[...], preferred_element_type=jnp.float32)
        + b_ref[...]
    )


def lstm_seq_kernel(xproj_ref, wh_ref, h0_ref, c0_ref,
                    h_seq_ref, c_final_ref,
                    h_scr, c_scr):
    """One grid step == one timestep. (h, c) state lives in VMEM scratch."""
    t = pl.program_id(0)
    H = h_scr.shape[1]

    @pl.when(t == 0)
    def _():
        h_scr[...] = h0_ref[...]
        c_scr[...] = c0_ref[...]

    h_prev = h_scr[...]
    c_prev = c_scr[...]

    # Fused (B, 4H) gate pre-activations: hoisted (x@Wx + b) plus h@Wh.
    pre = xproj_ref[0] + jnp.dot(
        h_prev, wh_ref[...], preferred_element_type=jnp.float32)

    # One sigmoid pass over the full lane-dense 4H width, one tanh on the c slice.
    sig = jax.nn.sigmoid(pre)
    f = sig[:, 0 * H:1 * H]
    i = sig[:, 1 * H:2 * H]
    o = sig[:, 3 * H:4 * H]
    c_hat = jnp.tanh(pre[:, 2 * H:3 * H])

    c_next = f * c_prev + i * c_hat
    h_next = o * jnp.tanh(c_next)

    h_scr[...] = h_next
    c_scr[...] = c_next

    h_seq_ref[0] = h_next.astype(h_seq_ref.dtype)
    # Resident output block (constant index_map): written back to HBM once.
    c_final_ref[...] = c_next.astype(c_final_ref.dtype)


@jax.jit
def lstm_forward_sequence(sequence, hidden0, cell0, wx, wh, b):
    """Run the full recurrence. sequence: (B, T, In).

    Returns (h_seq of shape (T, B, H), final hidden, final cell).
    """
    B, T, In = sequence.shape
    H = wh.shape[0]
    G = 4 * H

    vmem = pl.BlockSpec(memory_space=pltpu.MemorySpace.VMEM)

    # Hoisted input projection for all timesteps: one lane-dense matmul.
    x_tb = jnp.transpose(sequence, (1, 0, 2)).reshape(T * B, In)
    xproj = pl.pallas_call(
        input_proj_kernel,
        out_shape=jax.ShapeDtypeStruct((T * B, G), jnp.float32),
        in_specs=[vmem, vmem, vmem],
        out_specs=vmem,
    )(x_tb, wx, b).reshape(T, B, G)

    h_seq, c_final = pl.pallas_call(
        lstm_seq_kernel,
        out_shape=(
            jax.ShapeDtypeStruct((T, B, H), jnp.float32),
            jax.ShapeDtypeStruct((B, H), jnp.float32),
        ),
        grid_spec=pltpu.PrefetchScalarGridSpec(
            num_scalar_prefetch=0,
            grid=(T,),
            in_specs=[
                pl.BlockSpec((1, B, G), lambda t: (t, 0, 0)),  # per-step x-proj
                pl.BlockSpec((H, G), lambda t: (0, 0)),        # Wh resident
                pl.BlockSpec((B, H), lambda t: (0, 0)),        # h0 resident
                pl.BlockSpec((B, H), lambda t: (0, 0)),        # c0 resident
            ],
            out_specs=[
                pl.BlockSpec((1, B, H), lambda t: (t, 0, 0)),  # per-step hidden
                pl.BlockSpec((B, H), lambda t: (0, 0)),        # final cell
            ],
            scratch_shapes=[
                pltpu.VMEM((B, H), jnp.float32),   # h carry
                pltpu.VMEM((B, H), jnp.float32),   # c carry
            ],
        ),
        compiler_params=pltpu.CompilerParams(
            dimension_semantics=("arbitrary",)),   # time axis is sequential
    )(xproj, wh, hidden0, cell0)

    return h_seq, h_seq[-1], c_final


def lstm_cell_forward(x, cell_state, hidden, wx, wh, b):
    """Single-step forward matching LSTMCell.forward(x, cell_state, hidden)."""
    _, h_next, c_next = lstm_forward_sequence(
        x[:, None, :], hidden, cell_state, wx, wh, b)
    return c_next, h_next


def lstm_process_sequence(sequence, wx, wh, b):
    """Matches LSTMCell.process_sequence for a 3-D (B, T, In) input."""
    B, T, _ = sequence.shape
    H = wh.shape[0]
    h0 = jnp.zeros((B, H), jnp.float32)
    c0 = jnp.zeros((B, H), jnp.float32)
    h_seq, h_final, c_final = lstm_forward_sequence(sequence, h0, c0, wx, wh, b)
    outputs = [h_seq[t] for t in range(T)]
    return outputs, h_final, c_final


def init_linear_params(key, in_features, out_features):
    """torch.nn.Linear-style init; weight already transposed to (in, out)."""
    k_w, k_b = jax.random.split(key)
    bound = 1.0 / jnp.sqrt(jnp.float32(in_features))
    w = jax.random.uniform(k_w, (in_features, out_features), jnp.float32,
                           minval=-bound, maxval=bound)
    b = jax.random.uniform(k_b, (1, out_features), jnp.float32,
                           minval=-bound, maxval=bound)
    return w, b


def pack_params(params, input_size):
    """Fuse the 4 gate Linears (order f, i, c, o) and split into Wx / Wh / b."""
    (wf, bf), (wi, bi), (wc, bc), (wo, bo) = params
    w = jnp.concatenate([wf, wi, wc, wo], axis=1)   # (concat, 4H)
    b = jnp.concatenate([bf, bi, bc, bo], axis=1)   # (1, 4H)
    return w[:input_size, :], w[input_size:, :], b


def reference_step(x, cell_state, hidden, params):
    """Pure-JAX reference mirroring the PyTorch LSTMCell.forward exactly."""
    hi = jax.lax.Precision.HIGHEST
    (wf, bf), (wi, bi), (wc, bc), (wo, bo) = params
    gin = jnp.concatenate([x, hidden], axis=1)
    f = jax.nn.sigmoid(jnp.dot(gin, wf, precision=hi) + bf)
    i = jax.nn.sigmoid(jnp.dot(gin, wi, precision=hi) + bi)
    c_hat = jnp.tanh(jnp.dot(gin, wc, precision=hi) + bc)
    o = jax.nn.sigmoid(jnp.dot(gin, wo, precision=hi) + bo)
    c_next = f * cell_state + i * c_hat
    h_next = o * jnp.tanh(c_next)
    return c_next, h_next


if __name__ == "__main__":
    batch = 2
    input_size = 16
    hidden_size = 32
    seq_len = 8
    concat_size = input_size + hidden_size

    key = jax.random.PRNGKey(0)
    k_seq, k_f, k_i, k_c, k_o = jax.random.split(key, 5)

    params = (
        init_linear_params(k_f, concat_size, hidden_size),  # ff_f
        init_linear_params(k_i, concat_size, hidden_size),  # ff_i
        init_linear_params(k_c, concat_size, hidden_size),  # ff_c
        init_linear_params(k_o, concat_size, hidden_size),  # ff_o
    )
    wx, wh, b = pack_params(params, input_size)

    sequence = jax.random.normal(k_seq, (batch, seq_len, input_size), jnp.float32)

    # --- Pallas path: whole sequence inside one recurrent kernel. ---
    outputs, hidden, cell = lstm_process_sequence(sequence, wx, wh, b)
    jax.block_until_ready((hidden, cell))

    # --- Pure-JAX reference loop mirroring the PyTorch module. ---
    ref_hidden = jnp.zeros((batch, hidden_size), jnp.float32)
    ref_cell = jnp.zeros((batch, hidden_size), jnp.float32)
    ref_outputs = []
    for t in range(seq_len):
        ref_cell, ref_hidden = reference_step(
            sequence[:, t, :], ref_cell, ref_hidden, params)
        ref_outputs.append(ref_hidden)

    assert hidden.shape == (batch, hidden_size)
    assert cell.shape == (batch, hidden_size)
    assert len(outputs) == seq_len
    assert jnp.allclose(hidden, ref_hidden, atol=1e-4, rtol=1e-4), "hidden mismatch"
    assert jnp.allclose(cell, ref_cell, atol=1e-4, rtol=1e-4), "cell mismatch"
    for t in range(seq_len):
        assert jnp.allclose(outputs[t], ref_outputs[t], atol=1e-4, rtol=1e-4), \
            f"per-step hidden mismatch at t={t}"

    # Single-step LSTMCell.forward semantics (T=1 instance of the same kernel).
    z = jnp.zeros((batch, hidden_size), jnp.float32)
    c1, h1 = lstm_cell_forward(sequence[:, 0, :], z, z, wx, wh, b)
    rc1, rh1 = reference_step(sequence[:, 0, :], z, z, params)
    jax.block_until_ready((c1, h1))
    assert jnp.allclose(c1, rc1, atol=1e-4, rtol=1e-4), "single-step cell mismatch"
    assert jnp.allclose(h1, rh1, atol=1e-4, rtol=1e-4), "single-step hidden mismatch"

    print("KERNEL_OK")
</pallas_src>

<mosaic_0001>
module attributes {stable_mosaic.version = 11 : i64} {
  func.func @input_proj_kernel(%arg0: memref<16x16xf32, #tpu.memory_space<vmem>>, %arg1: memref<16x128xf32, #tpu.memory_space<vmem>>, %arg2: memref<1x128xf32, #tpu.memory_space<vmem>>, %arg3: memref<16x128xf32, #tpu.memory_space<vmem>>) attributes {dimension_semantics = [], scalar_prefetch = 0 : i64, scratch_operands = 0 : i64, tpu.core_type = #tpu.core_type<tc>} {
    %c0 = arith.constant 0 : index
    %c0_0 = arith.constant 0 : index
    %0 = vector.load %arg0[%c0, %c0_0] : memref<16x16xf32, #tpu.memory_space<vmem>>, vector<16x16xf32>
    %c0_1 = arith.constant 0 : index
    %c0_2 = arith.constant 0 : index
    %1 = vector.load %arg1[%c0_1, %c0_2] : memref<16x128xf32, #tpu.memory_space<vmem>>, vector<16x128xf32>
    %cst = arith.constant dense<0.000000e+00> : vector<16x128xf32>
    %2 = tpu.matmul %0, %1, %cst {dimension_numbers = #tpu.dot_dimension_numbers<[1], [0], [0], [1], [0, 0, 1, 1], [], []>} : vector<16x16xf32>, vector<16x128xf32>, vector<16x128xf32> -> vector<16x128xf32>
    %c0_3 = arith.constant 0 : index
    %c0_4 = arith.constant 0 : index
    %3 = vector.load %arg2[%c0_3, %c0_4] : memref<1x128xf32, #tpu.memory_space<vmem>>, vector<1x128xf32>
    %4 = vector.broadcast %3 : vector<1x128xf32> to vector<16x128xf32>
    %5 = arith.addf %2, %4 : vector<16x128xf32>
    %c0_5 = arith.constant 0 : index
    %c0_6 = arith.constant 0 : index
    %6 = vector.load %arg3[%c0_5, %c0_6] : memref<16x128xf32, #tpu.memory_space<vmem>>, vector<16x128xf32>
    tpu.vector_store %arg3[%c0_5, %c0_6], %5 {strides = array<i32>} : memref<16x128xf32, #tpu.memory_space<vmem>>, vector<16x128xf32>,
    return
  }
}

module attributes {stable_mosaic.version = 11 : i64} {
  func.func @lstm_seq_kernel(%arg0: i32, %arg1: memref<1x2x128xf32, #tpu.memory_space<vmem>>, %arg2: memref<32x128xf32, #tpu.memory_space<vmem>>, %arg3: memref<2x32xf32, #tpu.memory_space<vmem>>, %arg4: memref<2x32xf32, #tpu.memory_space<vmem>>, %arg5: memref<1x2x32xf32, #tpu.memory_space<vmem>>, %arg6: memref<2x32xf32, #tpu.memory_space<vmem>>, %arg7: memref<2x32xf32, #tpu.memory_space<vmem>>, %arg8: memref<2x32xf32, #tpu.memory_space<vmem>>) attributes {dimension_semantics = [#tpu.dimension_semantics<arbitrary>], iteration_bounds = array<i64: 8>, scalar_prefetch = 0 : i64, scratch_operands = 2 : i64, tpu.core_type = #tpu.core_type<tc>, window_params = [{transform_indices = @transform_0, window_bounds = array<i64: 1, 2, 128>}, {pipeline_mode = #tpu.pipeline_mode<synchronous>, transform_indices = @transform_1, window_bounds = array<i64: 32, 128>}, {pipeline_mode = #tpu.pipeline_mode<synchronous>, transform_indices = @transform_2, window_bounds = array<i64: 2, 32>}, {pipeline_mode = #tpu.pipeline_mode<synchronous>, transform_indices = @transform_3, window_bounds = array<i64: 2, 32>}, {transform_indices = @transform_4, window_bounds = array<i64: 1, 2, 32>}, {pipeline_mode = #tpu.pipeline_mode<synchronous>, transform_indices = @transform_5, window_bounds = array<i64: 2, 32>}]} {
    %c0_i32 = arith.constant 0 : i32
    %0 = arith.cmpi eq, %arg0, %c0_i32 : i32
    %1 = arith.extui %0 : i1 to i32
    %c0_i32_0 = arith.constant 0 : i32
    %2 = arith.cmpi ne, %1, %c0_i32_0 : i32
    scf.if %2 {
      %c0_19 = arith.constant 0 : index
      %c0_20 = arith.constant 0 : index
      %31 = vector.load %arg3[%c0_19, %c0_20] : memref<2x32xf32, #tpu.memory_space<vmem>>, vector<2x32xf32>
      %c0_21 = arith.constant 0 : index
      %c0_22 = arith.constant 0 : index
      %32 = vector.load %arg7[%c0_21, %c0_22] : memref<2x32xf32, #tpu.memory_space<vmem>>, vector<2x32xf32>
      tpu.vector_store %arg7[%c0_21, %c0_22], %31 {strides = array<i32>} : memref<2x32xf32, #tpu.memory_space<vmem>>, vector<2x32xf32>,
      %c0_23 = arith.constant 0 : index
      %c0_24 = arith.constant 0 : index
      %33 = vector.load %arg4[%c0_23, %c0_24] : memref<2x32xf32, #tpu.memory_space<vmem>>, vector<2x32xf32>
      %c0_25 = arith.constant 0 : index
      %c0_26 = arith.constant 0 : index
      %34 = vector.load %arg8[%c0_25, %c0_26] : memref<2x32xf32, #tpu.memory_space<vmem>>, vector<2x32xf32>
      tpu.vector_store %arg8[%c0_25, %c0_26], %33 {strides = array<i32>} : memref<2x32xf32, #tpu.memory_space<vmem>>, vector<2x32xf32>,
    } else {
    }
    %c0 = arith.constant 0 : index
    %c0_1 = arith.constant 0 : index
    %3 = vector.load %arg7[%c0, %c0_1] : memref<2x32xf32, #tpu.memory_space<vmem>>, vector<2x32xf32>
    %c0_2 = arith.constant 0 : index
    %c0_3 = arith.constant 0 : index
    %4 = vector.load %arg8[%c0_2, %c0_3] : memref<2x32xf32, #tpu.memory_space<vmem>>, vector<2x32xf32>
    %c0_4 = arith.constant 0 : index
    %c0_5 = arith.constant 0 : index
    %c0_6 = arith.constant 0 : index
    %5 = vector.load %arg1[%c0_4, %c0_5, %c0_6] : memref<1x2x128xf32, #tpu.memory_space<vmem>>, vector<1x2x128xf32>
    %6 = vector.shape_cast %5 : vector<1x2x128xf32> to vector<2x128xf32>
    %c0_7 = arith.constant 0 : index
    %c0_8 = arith.constant 0 : index
    %7 = vector.load %arg2[%c0_7, %c0_8] : memref<32x128xf32, #tpu.memory_space<vmem>>, vector<32x128xf32>
    %cst = arith.constant dense<0.000000e+00> : vector<2x128xf32>
    %8 = tpu.matmul %3, %7, %cst {dimension_numbers = #tpu.dot_dimension_numbers<[1], [0], [0], [1], [0, 0, 1, 1], [], []>} : vector<2x32xf32>, vector<32x128xf32>, vector<2x128xf32> -> vector<2x128xf32>
    %9 = arith.addf %6, %8 : vector<2x128xf32>
    %10 = arith.negf %9 : vector<2x128xf32>
    %11 = math.exp %10 : vector<2x128xf32>
    %cst_9 = arith.constant 1.000000e+00 : f32
    %12 = vector.broadcast %cst_9 : f32 to vector<2x128xf32>
    %13 = arith.addf %12, %11 : vector<2x128xf32>
    %14 = arith.divf %12, %13 : vector<2x128xf32>
    %15 = vector.extract_strided_slice %14 {offsets = [0, 0], sizes = [2, 32], strides = [1, 1]} : vector<2x128xf32> to vector<2x32xf32>
    %16 = vector.extract_strided_slice %14 {offsets = [0, 32], sizes = [2, 32], strides = [1, 1]} : vector<2x128xf32> to vector<2x32xf32>
    %17 = vector.extract_strided_slice %14 {offsets = [0, 96], sizes = [2, 32], strides = [1, 1]} : vector<2x128xf32> to vector<2x32xf32>
    %18 = vector.extract_strided_slice %9 {offsets = [0, 64], sizes = [2, 32], strides = [1, 1]} : vector<2x128xf32> to vector<2x32xf32>
    %19 = math.tanh %18 : vector<2x32xf32>
    %20 = arith.mulf %15, %4 : vector<2x32xf32>
    %21 = arith.mulf %16, %19 : vector<2x32xf32>
    %22 = arith.addf %20, %21 : vector<2x32xf32>
    %23 = math.tanh %22 : vector<2x32xf32>
    %24 = arith.mulf %17, %23 : vector<2x32xf32>
    %c0_10 = arith.constant 0 : index
    %c0_11 = arith.constant 0 : index
    %25 = vector.load %arg7[%c0_10, %c0_11] : memref<2x32xf32, #tpu.memory_space<vmem>>, vector<2x32xf32>
    tpu.vector_store %arg7[%c0_10, %c0_11], %24 {strides = array<i32>} : memref<2x32xf32, #tpu.memory_space<vmem>>, vector<2x32xf32>,
    %c0_12 = arith.constant 0 : index
    %c0_13 = arith.constant 0 : index
    %26 = vector.load %arg8[%c0_12, %c0_13] : memref<2x32xf32, #tpu.memory_space<vmem>>, vector<2x32xf32>
    tpu.vector_store %arg8[%c0_12, %c0_13], %22 {strides = array<i32>} : memref<2x32xf32, #tpu.memory_space<vmem>>, vector<2x32xf32>,
    %c0_14 = arith.constant 0 : index
    %c0_15 = arith.constant 0 : index
    %c0_16 = arith.constant 0 : index
    %27 = vector.load %arg5[%c0_14, %c0_15, %c0_16] : memref<1x2x32xf32, #tpu.memory_space<vmem>>, vector<1x2x32xf32>
    %28 = vector.shape_cast %27 : vector<1x2x32xf32> to vector<2x32xf32>
    %29 = vector.shape_cast %24 : vector<2x32xf32> to vector<1x2x32xf32>
    tpu.vector_store %arg5[%c0_14, %c0_15, %c0_16], %29 {strides = array<i32>} : memref<1x2x32xf32, #tpu.memory_space<vmem>>, vector<1x2x32xf32>,
    %c0_17 = arith.constant 0 : index
    %c0_18 = arith.constant 0 : index
    %30 = vector.load %arg6[%c0_17, %c0_18] : memref<2x32xf32, #tpu.memory_space<vmem>>, vector<2x32xf32>
    tpu.vector_store %arg6[%c0_17, %c0_18], %22 {strides = array<i32>} : memref<2x32xf32, #tpu.memory_space<vmem>>, vector<2x32xf32>,
    return
  }
  func.func @transform_0(%arg0: i32) -> (i32, i32, i32) {
    %c0_i32 = arith.constant 0 : i32
    %c0_i32_0 = arith.constant 0 : i32
    %c0_i32_1 = arith.constant 0 : i32
    return %arg0, %c0_i32, %c0_i32_0 : i32, i32, i32
  }
  func.func @transform_1(%arg0: i32) -> (i32, i32) {
    %c0_i32 = arith.constant 0 : i32
    %c0_i32_0 = arith.constant 0 : i32
    %c0_i32_1 = arith.constant 0 : i32
    return %c0_i32, %c0_i32_0 : i32, i32
  }
  func.func @transform_2(%arg0: i32) -> (i32, i32) {
    %c0_i32 = arith.constant 0 : i32
    %c0_i32_0 = arith.constant 0 : i32
    %c0_i32_1 = arith.constant 0 : i32
    return %c0_i32, %c0_i32_0 : i32, i32
  }
  func.func @transform_3(%arg0: i32) -> (i32, i32) {
    %c0_i32 = arith.constant 0 : i32
    %c0_i32_0 = arith.constant 0 : i32
    %c0_i32_1 = arith.constant 0 : i32
    return %c0_i32, %c0_i32_0 : i32, i32
  }
  func.func @transform_4(%arg0: i32) -> (i32, i32, i32) {
    %c0_i32 = arith.constant 0 : i32
    %c0_i32_0 = arith.constant 0 : i32
    %c0_i32_1 = arith.constant 0 : i32
    return %arg0, %c0_i32, %c0_i32_0 : i32, i32, i32
  }
  func.func @transform_5(%arg0: i32) -> (i32, i32) {
    %c0_i32 = arith.constant 0 : i32
    %c0_i32_0 = arith.constant 0 : i32
    %c0_i32_1 = arith.constant 0 : i32
    return %c0_i32, %c0_i32_0 : i32, i32
  }
}

</mosaic_0001>

<llo_original>
// kernel: lstm_forward_sequence.2
$region0: #{lstm_forward_sequence.2}
  #allocation0 [shape = 'u32[]', space=smem, size = 0x4, offset = 0x4, fixed_abs, tag = 'smem constant byte address 0x4 - core index']
  #allocation1 [shape = 'u32[144,128]{1,0:T(1,128)}', space=vmem, size = 0x12000, scoped, tag = 'internal scratch']
  %s0 = inlined_call_operand.vmem [shape: f32[16,16], index: 0, kind: input, shape index: {}]
  %s1 = inlined_call_operand.vmem [shape: f32[16,128], index: 1, kind: input, shape index: {}]
  %s2 = inlined_call_operand.vmem [shape: f32[1,128], index: 2, kind: input, shape index: {}]
  %s3 = inlined_call_operand.vmem [shape: f32[16,128], index: 3, kind: output, shape index: {}]
  %s4 = sld [smem:[#allocation0]]
  $region22: #{lstm_forward_sequence.2} parent=0
    _
  %s6 = ssub.s32 1, %s4
  %s7 = scalar_select 0, %s6, %s4
  // Predicated region
  $region2: #{lstm_forward_sequence.2} parent=0 // pred_check
    _
  $region3: #{lstm_forward_sequence.2} parent=0 // pred_check_branch
    %9 = sbr.rel (0) target = $region5
  $region4: #{lstm_forward_sequence.2} parent=0 // pred_region
    _
  $region5: #{lstm_forward_sequence.2} parent=0 // pred_fallthru
    _
  // Predicated region
  $region6: #{lstm_forward_sequence.2} parent=0 // pred_check
    _
  $region7: #{lstm_forward_sequence.2} parent=0 // pred_check_branch
    %11 = sbr.rel (0) target = $region9
  $region8: #{lstm_forward_sequence.2} parent=0 // pred_region
    _
  $region9: #{lstm_forward_sequence.2} parent=0 // pred_fallthru
    _
  // Predicated region
  $region10: #{lstm_forward_sequence.2} parent=0 // pred_check
    _
  $region11: #{lstm_forward_sequence.2} parent=0 // pred_check_branch
    %13 = sbr.rel (0) target = $region13
  $region12: #{lstm_forward_sequence.2} parent=0 // pred_region
    _
  $region13: #{lstm_forward_sequence.2} parent=0 // pred_fallthru
    _
  %v14 = vld [vmem:[%s0] sm:$0xff]
  %v15 = vld [vmem:[%s0 + $0x8] sm:$0xff]
  %v16 = vld [vmem:[%s1] sm:$0xff]
  %v17 = vld [vmem:[%s1 + $0x8] sm:$0xff]
  %v18 = vld [vmem:[%s2] sm:$0x1]
  %v20 = vlaneseq
  %v21 = vshrl.u32 %v20, 7
  %v22 = vsub.s32 0, %v21
  %v23 = vrot.slane %v18, %v22
  %vm25 = vcmask 130048
  %v27 = vsel %vm25, %v14, 0
  %v30 = vsel %vm25, %v15, 0
  %32 = vmatprep.subr.mxu0 0.0
  %33 = vmatpush1.msra.mxu0 0.0
  %34 = vmatprep.subr.mxu0 0.0
  %35 = vmatpush1.msra.mxu0 0.0
  %36 = vmatprep.subr.mxu0 0.0
  %37 = vmatpush1.msra.mxu0 0.0
  %38 = vmatprep.subr.mxu0 0.0
  %39 = vmatpush1.msra.mxu0 0.0
  %40 = vmatprep.subr.mxu0 0.0
  %41 = vmatpush1.msra.mxu0 0.0
  %42 = vmatprep.subr.mxu0 0.0
  %43 = vmatpush1.msra.mxu0 0.0
  %44 = vmatprep.subr.mxu0 0.0
  %45 = vmatpush1.msra.mxu0 0.0
  %46 = vmatprep.subr.mxu0 0.0
  %47 = vmatpush1.msra.mxu0 0.0
  %48 = vmatprep.subr.mxu0 0.0
  %49 = vmatpush1.msra.mxu0 0.0
  %50 = vmatprep.subr.mxu0 0.0
  %51 = vmatpush1.msra.mxu0 0.0
  %52 = vmatprep.subr.mxu0 0.0
  %53 = vmatpush1.msra.mxu0 0.0
  %54 = vmatprep.subr.mxu0 0.0
  %55 = vmatpush1.msra.mxu0 0.0
  %56 = vmatprep.subr.mxu0 0.0
  %57 = vmatpush1.msra.mxu0 0.0
  %58 = vmatprep.subr.mxu0 0.0
  %59 = vmatpush1.msra.mxu0 0.0
  %60 = vmatprep.subr.mxu0 0.0
  %61 = vmatpush1.msra.mxu0 %v17
  %62 = vmatprep.subr.mxu0 0.0
  %63 = vmatpush1.msra.mxu0 %v16
  %64 = vmatprep.subr.mxu0 0.0
  %65 = vmatpush2.msra.mxu0 0.0
  %66 = vmatprep.subr.mxu0 0.0
  %67 = vmatpush2.msra.mxu0 0.0
  %68 = vmatprep.subr.mxu0 0.0
  %69 = vmatpush2.msra.mxu0 0.0
  %70 = vmatprep.subr.mxu0 0.0
  %71 = vmatpush2.msra.mxu0 0.0
  %72 = vmatprep.subr.mxu0 0.0
  %73 = vmatpush2.msra.mxu0 0.0
  %74 = vmatprep.subr.mxu0 0.0
  %75 = vmatpush2.msra.mxu0 0.0
  %76 = vmatprep.subr.mxu0 0.0
  %77 = vmatpush2.msra.mxu0 0.0
  %78 = vmatprep.subr.mxu0 0.0
  %79 = vmatpush2.msra.mxu0 0.0
  %80 = vmatprep.subr.mxu0 0.0
  %81 = vmatpush2.msra.mxu0 0.0
  %82 = vmatprep.subr.mxu0 0.0
  %83 = vmatpush2.msra.mxu0 0.0
  %84 = vmatprep.subr.mxu0 0.0
  %85 = vmatpush2.msra.mxu0 0.0
  %86 = vmatprep.subr.mxu0 0.0
  %87 = vmatpush2.msra.mxu0 0.0
  %88 = vmatprep.subr.mxu0 0.0
  %89 = vmatpush2.msra.mxu0 0.0
  %90 = vmatprep.subr.mxu0 0.0
  %91 = vmatpush2.msra.mxu0 0.0
  %92 = vmatprep.subr.mxu0 0.0
  %93 = vmatpush2.msra.mxu0 0.0
  %94 = vmatprep.subr.mxu0 0.0
  %95 = vmatpush2.msra.mxu0 0.0
  %96 = vmatprep.mubr.f32.mxu0 0.0
  %97 = vmatmul.mubr.f32.gmra.mxu0 %v27
  %v98 = vpop.f32.mrf.mxu0
  %v99 = vadd.f32 %v23, %v98
  %v100 = vpop.f32.mrf.mxu0
  %101 = vmatprep.mubr.f32.mxu0 0.0
  %102 = vmatmul.mubr.f32.gmra.mxu0 %v30
  %v103 = vpop.f32.mrf.mxu0
  %v104 = vadd.f32 %v23, %v103
  %v105 = vpop.f32.mrf.mxu0
  %106 = vdwg.mxu0
  %107 = vst [vmem:[%s3] sm:$0xff] %v99
  %108 = vst [vmem:[%s3 + $0x8] sm:$0xff] %v104
  // Predicated region
  $region14: #{lstm_forward_sequence.2} parent=0 // pred_check
    _
  $region15: #{lstm_forward_sequence.2} parent=0 // pred_check_branch
    %110 = sbr.rel (0) target = $region17
  $region16: #{lstm_forward_sequence.2} parent=0 // pred_region
    _
  $region17: #{lstm_forward_sequence.2} parent=0 // pred_fallthru
    _
  // Predicated region
  $region18: #{lstm_forward_sequence.2} parent=0 // pred_check
    _
  $region19: #{lstm_forward_sequence.2} parent=0 // pred_check_branch
    %112 = sbr.rel (0) target = $region21
  $region20: #{lstm_forward_sequence.2} parent=0 // pred_region
    _
  $region21: #{lstm_forward_sequence.2} parent=0 // pred_fallthru
    _

// kernel: lstm_forward_sequence.3
$region0: #{lstm_forward_sequence.3}
  #allocation0 [shape = 'u32[]', space=smem, size = 0x4, offset = 0x4, fixed_abs, tag = 'smem constant byte address 0x4 - core index']
  #allocation1 [shape = 'u32[144,128]{1,0:T(1,128)}', space=vmem, size = 0x12000, scoped, tag = 'internal scratch']
  #allocation2 [shape = 'f32[2,32]{1,0:T(2,128)}', space=vmem, size = 0x400, scoped, tag = 'scratch operand']
  #allocation3 [shape = 'f32[2,32]{1,0:T(2,128)}', space=vmem, size = 0x400, scoped, tag = 'scratch operand']
  %s0 = inlined_call_operand.vmem [shape: f32[8,2,128], index: 0, kind: input, shape index: {}]
  %s1 = inlined_call_operand.vmem [shape: f32[32,128], index: 1, kind: input, shape index: {}]
  %s2 = inlined_call_operand.vmem [shape: f32[2,32], index: 2, kind: input, shape index: {}]
  %s3 = inlined_call_operand.vmem [shape: f32[2,32], index: 3, kind: input, shape index: {}]
  %s4 = inlined_call_operand.vmem [shape: f32[8,2,32], index: 4, kind: output, shape index: {0}]
  %s5 = inlined_call_operand.hbm [shape: f32[2,32], index: 5, kind: output, shape index: {1}]
  %6 = xla_tuple %s4, %s5
  %s7 = sld [smem:[#allocation0]]
  $region61: #{lstm_forward_sequence.3} parent=0
    _
  %s9 = ssub.s32 1, %s7
  %s10 = scalar_select 0, %s9, %s7
  $region1: #{lstm_forward_sequence.3} parent=0
    #allocation4 [shape = 'u8[1024]{0}', space=vmem, size = 0x400, scoped, tag = 'output window, operand 1, single buffered']
    #allocation5 [shape = 's32[2]{0}', space=sflag, size = 0x8, scoped, tag = 'scoped memory for lstm_forward_sequence.3']
    %11 = vsyncpa [#allocation5], 0
    loop: start=0, step=1, limit=10
    $region2: #{lstm_forward_sequence.3} parent=1 // loop_pre_header
      _
    $region3: #{lstm_forward_sequence.3} parent=1 // loop_header
      %s13 = sphi 0, %s17
      %p14 = scmp.ge.s32.totalorder %s13, 10
      %s23 = sphi 0, %s25
      %s26 = sphi 0, %s23
      %s27 = sphi 0, %s26
      %s43 = sphi 0, %s27
      %s47 = sphi 0, %s47
      %s49 = sphi 0, %s47
      %s50 = sphi 0, %s49
      %s64 = sphi 0, %s50
      %s68 = sphi 0, %s68
      %s70 = sphi 0, %s68
      %s71 = sphi 0, %s70
      %s85 = sphi 0, %s71
      %s89 = sphi 0, %s89
      %s91 = sphi 0, %s89
      %s92 = sphi 0, %s91
      %s106 = sphi 0, %s92
      %s112 = sphi 0, %s114
      %s115 = sphi 0, %s112
      %s116 = sphi 0, %s115
      %s132 = sphi 0, %s116
      %s136 = sphi 0, %s136
      %s138 = sphi 0, %s136
      %s139 = sphi 0, %s138
      %s153 = sphi 0, %s139
    $region4: #{lstm_forward_sequence.3} parent=1 // loop_header_branch
      %16 = sbr.rel (%p14) target = $region8
    $region5: #{lstm_forward_sequence.3} parent=1 // loop_body
      %s18 = ssub.s32 %s13, 1
      %s19 = ssub.s32 %s13, 2
      %s20 = sadd.s32 %s13, 1
      %s21 = ssub.s32 %s13, %s20
      %p22 = scmp.eq.s32.totalorder %s21, 0
      %s24 = sadd.s32 %s23, 1
      %s25 = scalar_select %p22, %s23, %s24
      %p28 = pneg %p22
      %p29 = scmp.eq.s32.totalorder %s13, 7
      %p30 = por %p28, %p29
      %p31 = scmp.ne.s32.totalorder %s23, %s26
      %p32 = scmp.eq.s32.totalorder %s13, 0
      %p33 = por %p31, %p32
      %p34 = scmp.ne.s32.totalorder %s23, %s26
      %p35 = scmp.eq.s32.totalorder %s18, 7
      %p36 = por %p34, %p35
      %p37 = scmp.ne.s32.totalorder %s26, %s27
      %p38 = scmp.eq.s32.totalorder %s18, 0
      %p39 = por %p37, %p38
      %p40 = scmp.ne.s32.totalorder %s26, %s27
      %p41 = scmp.eq.s32.totalorder %s19, 7
      %p42 = por %p40, %p41
      %p44 = scmp.ne.s32.totalorder %s27, %s43
      %p45 = scmp.eq.s32.totalorder %s19, 0
      %p46 = por %p44, %p45
      %s48 = sadd.s32 %s47, 1
      %p51 = scmp.eq.s32.totalorder %s13, 7
      %p52 = scmp.ne.s32.totalorder %s47, %s49
      %p53 = scmp.eq.s32.totalorder %s13, 0
      %p54 = por %p52, %p53
      %p55 = scmp.ne.s32.totalorder %s47, %s49
      %p56 = scmp.eq.s32.totalorder %s18, 7
      %p57 = por %p55, %p56
      %p58 = scmp.ne.s32.totalorder %s49, %s50
      %p59 = scmp.eq.s32.totalorder %s18, 0
      %p60 = por %p58, %p59
      %p61 = scmp.ne.s32.totalorder %s49, %s50
      %p62 = scmp.eq.s32.totalorder %s19, 7
      %p63 = por %p61, %p62
      %p65 = scmp.ne.s32.totalorder %s50, %s64
      %p66 = scmp.eq.s32.totalorder %s19, 0
      %p67 = por %p65, %p66
      %s69 = sadd.s32 %s68, 1
      %p72 = scmp.eq.s32.totalorder %s13, 7
      %p73 = scmp.ne.s32.totalorder %s68, %s70
      %p74 = scmp.eq.s32.totalorder %s13, 0
      %p75 = por %p73, %p74
      %p76 = scmp.ne.s32.totalorder %s68, %s70
      %p77 = scmp.eq.s32.totalorder %s18, 7
      %p78 = por %p76, %p77
      %p79 = scmp.ne.s32.totalorder %s70, %s71
      %p80 = scmp.eq.s32.totalorder %s18, 0
      %p81 = por %p79, %p80
      %p82 = scmp.ne.s32.totalorder %s70, %s71
      %p83 = scmp.eq.s32.totalorder %s19, 7
      %p84 = por %p82, %p83
      %p86 = scmp.ne.s32.totalorder %s71, %s85
      %p87 = scmp.eq.s32.totalorder %s19, 0
      %p88 = por %p86, %p87
      %s90 = sadd.s32 %s89, 1
      %p93 = scmp.eq.s32.totalorder %s13, 7
      %p94 = scmp.ne.s32.totalorder %s89, %s91
      %p95 = scmp.eq.s32.totalorder %s13, 0
      %p96 = por %p94, %p95
      %p97 = scmp.ne.s32.totalorder %s89, %s91
      %p98 = scmp.eq.s32.totalorder %s18, 7
      %p99 = por %p97, %p98
      %p100 = scmp.ne.s32.totalorder %s91, %s92
      %p101 = scmp.eq.s32.totalorder %s18, 0
      %p102 = por %p100, %p101
      %p103 = scmp.ne.s32.totalorder %s91, %s92
      %p104 = scmp.eq.s32.totalorder %s19, 7
      %p105 = por %p103, %p104
      %p107 = scmp.ne.s32.totalorder %s92, %s106
      %p108 = scmp.eq.s32.totalorder %s19, 0
      %p109 = por %p107, %p108
      %s110 = ssub.s32 %s13, %s20
      %p111 = scmp.eq.s32.totalorder %s110, 0
      %s113 = sadd.s32 %s112, 1
      %s114 = scalar_select %p111, %s112, %s113
      %p117 = pneg %p111
      %p118 = scmp.eq.s32.totalorder %s13, 7
      %p119 = por %p117, %p118
      %p120 = scmp.ne.s32.totalorder %s112, %s115
      %p121 = scmp.eq.s32.totalorder %s13, 0
      %p122 = por %p120, %p121
      %p123 = scmp.ne.s32.totalorder %s112, %s115
      %p124 = scmp.eq.s32.totalorder %s18, 7
      %p125 = por %p123, %p124
      %p126 = scmp.ne.s32.totalorder %s115, %s116
      %p127 = scmp.eq.s32.totalorder %s18, 0
      %p128 = por %p126, %p127
      %p129 = scmp.ne.s32.totalorder %s115, %s116
      %p130 = scmp.eq.s32.totalorder %s19, 7
      %p131 = por %p129, %p130
      %p133 = scmp.ne.s32.totalorder %s116, %s132
      %p134 = scmp.eq.s32.totalorder %s19, 0
      %p135 = por %p133, %p134
      %s137 = sadd.s32 %s136, 1
      %p140 = scmp.eq.s32.totalorder %s13, 7
      %p141 = scmp.ne.s32.totalorder %s136, %s138
      %p142 = scmp.eq.s32.totalorder %s13, 0
      %p143 = por %p141, %p142
      %p144 = scmp.ne.s32.totalorder %s136, %s138
      %p145 = scmp.eq.s32.totalorder %s18, 7
      %p146 = por %p144, %p145
      %p147 = scmp.ne.s32.totalorder %s138, %s139
      %p148 = scmp.eq.s32.totalorder %s18, 0
      %p149 = por %p147, %p148
      %p150 = scmp.ne.s32.totalorder %s138, %s139
      %p151 = scmp.eq.s32.totalorder %s19, 7
      %p152 = por %p150, %p151
      %p154 = scmp.ne.s32.totalorder %s139, %s153
      %p155 = scmp.eq.s32.totalorder %s19, 0
      %p156 = por %p154, %p155
      %p157 = scmp.le.s32.totalorder 1, %s13
      %p158 = scmp.lt.s32.totalorder %s13, 9
      %p159 = pnand %p157, %p158
      %p160 = pneg %p159
      // Predicated region
      $region9: #{lstm_forward_sequence.3} parent=5 // pred_check
        _
      $region10: #{lstm_forward_sequence.3} parent=5 // pred_check_branch
        %162 = sbr.rel (%p159) target = $region12
      $region11: #{lstm_forward_sequence.3} parent=5 // pred_region
        %s163 = ssub.s32 %s13, 1
        // Predicated region
        $region13: #{lstm_forward_sequence.3} parent=11 // pred_check
          %p164 = pneg %p60
        $region14: #{lstm_forward_sequence.3} parent=11 // pred_check_branch
          %166 = sbr.rel (%p164) target = $region16
        $region15: #{lstm_forward_sequence.3} parent=11 // pred_region
          _
        $region16: #{lstm_forward_sequence.3} parent=11 // pred_fallthru
          _
        // Predicated region
        $region17: #{lstm_forward_sequence.3} parent=11 // pred_check
          %p167 = pneg %p81
        $region18: #{lstm_forward_sequence.3} parent=11 // pred_check_branch
          %169 = sbr.rel (%p167) target = $region20
        $region19: #{lstm_forward_sequence.3} parent=11 // pred_region
          _
        $region20: #{lstm_forward_sequence.3} parent=11 // pred_fallthru
          _
        // Predicated region
        $region21: #{lstm_forward_sequence.3} parent=11 // pred_check
          %p170 = pneg %p102
        $region22: #{lstm_forward_sequence.3} parent=11 // pred_check_branch
          %172 = sbr.rel (%p170) target = $region24
        $region23: #{lstm_forward_sequence.3} parent=11 // pred_region
          _
        $region24: #{lstm_forward_sequence.3} parent=11 // pred_fallthru
          _
      $region12: #{lstm_forward_sequence.3} parent=5 // pred_fallthru
        _
      %p173 = scmp.lt.s32.totalorder %s13, 8
      // Predicated region
      $region25: #{lstm_forward_sequence.3} parent=5 // pred_check
        %p174 = pneg %p173
      $region26: #{lstm_forward_sequence.3} parent=5 // pred_check_branch
        %176 = sbr.rel (%p174) target = $region28
      $region27: #{lstm_forward_sequence.3} parent=5 // pred_region
        // Predicated region
        $region29: #{lstm_forward_sequence.3} parent=27 // pred_check
          %p177 = pneg %p33
        $region30: #{lstm_forward_sequence.3} parent=27 // pred_check_branch
          %179 = sbr.rel (%p177) target = $region32
        $region31: #{lstm_forward_sequence.3} parent=27 // pred_region
          %p180 = scmp.lt.s32.totalorder %s13, 7
          %s181 = scalar_select %p180, %s13, 7
          %s182 = smul.addr %s181, 2
          %s183 = scalar_lea.vmem %s0, %s182
        $region32: #{lstm_forward_sequence.3} parent=27 // pred_fallthru
          _
      $region28: #{lstm_forward_sequence.3} parent=5 // pred_fallthru
        _
      %p184 = scmp.le.s32.totalorder 1, %s13
      %p185 = scmp.lt.s32.totalorder %s13, 9
      %p186 = pnand %p184, %p185
      %p187 = pneg %p186
      // Predicated region
      $region33: #{lstm_forward_sequence.3} parent=5 // pred_check
        _
      $region34: #{lstm_forward_sequence.3} parent=5 // pred_check_branch
        %189 = sbr.rel (%p186) target = $region36
      $region35: #{lstm_forward_sequence.3} parent=5 // pred_region
        %s190 = ssub.s32 %s13, 1
        %p191 = scmp.lt.s32.totalorder %s18, 7
        %s192 = scalar_select %p191, %s18, 7
        %s193 = smul.addr %s192, 2
        %s194 = scalar_lea.vmem %s0, %s193
        %p195 = pneg %p39
        %p196 = pneg %p36
        %p197 = pneg %p60
        %p198 = pneg %p57
        %p199 = pneg %p81
        %p200 = pneg %p78
        %p201 = pneg %p102
        %p202 = pneg %p99
        %p203 = pneg %p128
        %p204 = pneg %p125
        %p205 = scmp.lt.s32.totalorder %s18, 7
        %s206 = scalar_select %p205, %s18, 7
        %s207 = smul.addr %s206, 2
        %s208 = scalar_lea.vmem %s4, %s207
        %p209 = pneg %p149
        %p210 = pneg %p146
        %p211 = scmp.lt.s32.totalorder %s18, 7
        %s212 = scalar_select %p211, %s18, 7
        %s213 = smul.addr %s212, 2
        %s214 = scalar_lea.vmem %s0, %s213
        %p215 = scmp.lt.s32.totalorder %s18, 7
        %s216 = scalar_select %p215, %s18, 7
        %s217 = smul.addr %s216, 2
        %s218 = scalar_lea.vmem %s4, %s217
        %p219 = scmp.eq.s32.totalorder %s18, 0
        // Predicated region
        $region37: #{lstm_forward_sequence.3} parent=35 // pred_check
          %p220 = pneg %p219
        $region38: #{lstm_forward_sequence.3} parent=35 // pred_check_branch
          %222 = sbr.rel (%p220) target = $region40
        $region39: #{lstm_forward_sequence.3} parent=35 // pred_region
          %v223 = vld [vmem:[%s2] sm:$0x3]
          %vm224 = vcmask 254976
          %225 = vst.msk [vmem:[#allocation2] sm:$0x3] %vm224, %v223
          %v226 = vld [vmem:[%s3] sm:$0x3]
          %227 = vst.msk [vmem:[#allocation3] sm:$0x3] %vm224, %v226
        $region40: #{lstm_forward_sequence.3} parent=35 // pred_fallthru
          _
        %v228 = vld [vmem:[#allocation2] sm:$0x3]
        %v229 = vld [vmem:[#allocation3] sm:$0x3]
        %v230 = vld [vmem:[%s214] sm:$0x3]
        %v231 = vld [vmem:[%s1] sm:$0xff]
        %v232 = vld [vmem:[%s1 + $0x8] sm:$0xff]
        %v233 = vld [vmem:[%s1 + $0x10] sm:$0xff]
        %v234 = vld [vmem:[%s1 + $0x18] sm:$0xff]
        %vm235 = vcmask 261120
        %v237 = vsel %vm235, %v228, 0
        %239 = vmatprep.subr.mxu0 0.0
        %240 = vmatpush1.msra.mxu0 0.0
        %241 = vmatprep.subr.mxu0 0.0
        %242 = vmatpush1.msra.mxu0 0.0
        %243 = vmatprep.subr.mxu0 0.0
        %244 = vmatpush1.msra.mxu0 0.0
        %245 = vmatprep.subr.mxu0 0.0
        %246 = vmatpush1.msra.mxu0 0.0
        %247 = vmatprep.subr.mxu0 0.0
        %248 = vmatpush1.msra.mxu0 0.0
        %249 = vmatprep.subr.mxu0 0.0
        %250 = vmatpush1.msra.mxu0 0.0
        %251 = vmatprep.subr.mxu0 0.0
        %252 = vmatpush1.msra.mxu0 0.0
        %253 = vmatprep.subr.mxu0 0.0
        %254 = vmatpush1.msra.mxu0 0.0
        %255 = vmatprep.subr.mxu0 0.0
        %256 = vmatpush1.msra.mxu0 0.0
        %257 = vmatprep.subr.mxu0 0.0
        %258 = vmatpush1.msra.mxu0 0.0
        %259 = vmatprep.subr.mxu0 0.0
        %260 = vmatpush1.msra.mxu0 0.0
        %261 = vmatprep.subr.mxu0 0.0
        %262 = vmatpush1.msra.mxu0 0.0
        %263 = vmatprep.subr.mxu0 0.0
        %264 = vmatpush1.msra.mxu0 %v234
        %265 = vmatprep.subr.mxu0 0.0
        %266 = vmatpush1.msra.mxu0 %v233
        %267 = vmatprep.subr.mxu0 0.0
        %268 = vmatpush1.msra.mxu0 %v232
        %269 = vmatprep.subr.mxu0 0.0
        %270 = vmatpush1.msra.mxu0 %v231
        %271 = vmatprep.subr.mxu0 0.0
        %272 = vmatpush2.msra.mxu0 0.0
        %273 = vmatprep.subr.mxu0 0.0
        %274 = vmatpush2.msra.mxu0 0.0
        %275 = vmatprep.subr.mxu0 0.0
        %276 = vmatpush2.msra.mxu0 0.0
        %277 = vmatprep.subr.mxu0 0.0
        %278 = vmatpush2.msra.mxu0 0.0
        %279 = vmatprep.subr.mxu0 0.0
        %280 = vmatpush2.msra.mxu0 0.0
        %281 = vmatprep.subr.mxu0 0.0
        %282 = vmatpush2.msra.mxu0 0.0
        %283 = vmatprep.subr.mxu0 0.0
        %284 = vmatpush2.msra.mxu0 0.0
        %285 = vmatprep.subr.mxu0 0.0
        %286 = vmatpush2.msra.mxu0 0.0
        %287 = vmatprep.subr.mxu0 0.0
        %288 = vmatpush2.msra.mxu0 0.0
        %289 = vmatprep.subr.mxu0 0.0
        %290 = vmatpush2.msra.mxu0 0.0
        %291 = vmatprep.subr.mxu0 0.0
        %292 = vmatpush2.msra.mxu0 0.0
        %293 = vmatprep.subr.mxu0 0.0
        %294 = vmatpush2.msra.mxu0 0.0
        %295 = vmatprep.subr.mxu0 0.0
        %296 = vmatpush2.msra.mxu0 0.0
        %297 = vmatprep.subr.mxu0 0.0
        %298 = vmatpush2.msra.mxu0 0.0
        %299 = vmatprep.subr.mxu0 0.0
        %300 = vmatpush2.msra.mxu0 0.0
        %301 = vmatprep.subr.mxu0 0.0
        %302 = vmatpush2.msra.mxu0 0.0
        %303 = vmatprep.mubr.f32.mxu0 0.0
        %304 = vmatmul.mubr.f32.gmra.mxu0 %v237
        %v305 = vpop.f32.mrf.mxu0
        %v306 = vadd.f32 0.0, %v305
        %v307 = vpop.f32.mrf.mxu0
        %308 = vdwg.mxu0
        %v309 = vadd.f32 %v230, %v306
        %v310 = vxor.u32 %v309, 2147483648
        %v311 = vmul.f32 %v310, 1.442695
        %v312 = vpow.pop %v311
        %v313 = vadd.f32 %v312, 1.0
        %v314 = vrcp.pop %v313
        %v315 = vmul.f32 1.0, %v314
        %v316 = vtanh.pop %v309
        %v317 = vmul.f32 %v315, %v229
        %319 = vrot.lane.b32.xlu0 %v316, 96
        %v320 = vpop.permute.xlu0 %319
        %v322 = vmul.f32 %v315, %v320
        %324 = vrot.lane.b32.xlu0 %v322, 96
        %v325 = vpop.permute.xlu0 %324
        %v327 = vadd.f32 %v317, %v325
        %v328 = vtanh.pop %v327
        %330 = vrot.lane.b32.xlu0 %v328, 96
        %v331 = vpop.permute.xlu0 %330
        %v333 = vmul.f32 %v315, %v331
        %335 = vrot.lane.b32.xlu0 %v333, 32
        %v336 = vpop.permute.xlu0 %335
        %vm338 = vcmask 254976
        %339 = vst.msk [vmem:[#allocation2] sm:$0x3] %vm338, %v336
        %340 = vst.msk [vmem:[#allocation3] sm:$0x3] %vm338, %v327
        %341 = vst.msk [vmem:[%s218] sm:$0x3] %vm338, %v336
        %342 = vst.msk [vmem:[#allocation4] sm:$0x3] %vm338, %v327
        %p343 = scmp.lt.s32.totalorder %s18, 7
        %s344 = scalar_select %p343, %s18, 7
        %s345 = smul.addr %s344, 2
        %s346 = scalar_lea.vmem %s4, %s345
        // Predicated region
        $region41: #{lstm_forward_sequence.3} parent=35 // pred_check
          %p347 = pneg %p125
        $region42: #{lstm_forward_sequence.3} parent=35 // pred_check_branch
          %349 = sbr.rel (%p347) target = $region44
        $region43: #{lstm_forward_sequence.3} parent=35 // pred_region
          _
        $region44: #{lstm_forward_sequence.3} parent=35 // pred_fallthru
          _
        // Predicated region
        $region45: #{lstm_forward_sequence.3} parent=35 // pred_check
          %p350 = pneg %p146
        $region46: #{lstm_forward_sequence.3} parent=35 // pred_check_branch
          %352 = sbr.rel (%p350) target = $region48
        $region47: #{lstm_forward_sequence.3} parent=35 // pred_region
          %s354 = ssub.s32 32, 32
          %355 = vsyncadd [#allocation5], %s354
          %s357 = sshll.u32 [#allocation4], 4
          %s358 = int_to_ptr.vmem [resolvable:$true] %s357
          %360 = dma.vmem_to_hbm [thread:$0]  %s358, 32, %s5, [#allocation5]
        $region48: #{lstm_forward_sequence.3} parent=35 // pred_fallthru
          _
        // Predicated region
        $region49: #{lstm_forward_sequence.3} parent=35 // pred_check
          %p361 = pneg %p146
        $region50: #{lstm_forward_sequence.3} parent=35 // pred_check_branch
          %363 = sbr.rel (%p361) target = $region52
        $region51: #{lstm_forward_sequence.3} parent=35 // pred_region
          %364 = dma.done [#allocation5], 32
        $region52: #{lstm_forward_sequence.3} parent=35 // pred_fallthru
          _
      $region36: #{lstm_forward_sequence.3} parent=5 // pred_fallthru
        _
      %p365 = scmp.le.s32.totalorder 2, %s13
      // Predicated region
      $region53: #{lstm_forward_sequence.3} parent=5 // pred_check
        %p366 = pneg %p365
      $region54: #{lstm_forward_sequence.3} parent=5 // pred_check_branch
        %368 = sbr.rel (%p366) target = $region56
      $region55: #{lstm_forward_sequence.3} parent=5 // pred_region
        %s369 = ssub.s32 %s13, 2
        // Predicated region
        $region57: #{lstm_forward_sequence.3} parent=55 // pred_check
          %p370 = pneg %p131
        $region58: #{lstm_forward_sequence.3} parent=55 // pred_check_branch
          %372 = sbr.rel (%p370) target = $region60
        $region59: #{lstm_forward_sequence.3} parent=55 // pred_region
          %p373 = scmp.lt.s32.totalorder %s19, 7
          %s374 = scalar_select %p373, %s19, 7
          %s375 = smul.addr %s374, 2
          %s376 = scalar_lea.vmem %s4, %s375
        $region60: #{lstm_forward_sequence.3} parent=55 // pred_fallthru
          _
      $region56: #{lstm_forward_sequence.3} parent=5 // pred_fallthru
        _
    $region6: #{lstm_forward_sequence.3} parent=1 // loop_footer
      %s17 = sadd.s32 1, %s13
    $region7: #{lstm_forward_sequence.3} parent=1 // loop_footer_branch
      %12 = sbr.rel target = $region3
    $region8: #{lstm_forward_sequence.3} parent=1 // loop_exit
      _
    %377 = vsyncpa [#allocation5], 1
    %s378 = scalar_lea.sflag [#allocation5], 1
    %379 = vsyncpa %s378, 1

</llo_original>
